<compile_context>
chip_gen: v6e
topology: v6e:2x2x1
jax: 0.10.0
libtpu: 0.0.40
codegen_flags: <defaults>
</compile_context>

<pallas_src>
import jax
import jax.numpy as jnp
from jax.experimental import pallas as pl
from jax.experimental.pallas import tpu as pltpu

_TILE_ROWS = 512                 # row-tile target for the row-blocked kernel
_VMEM_LIMIT = 32 * 1024 * 1024   # explicit scoped-VMEM limit (safe on v5e/v6e/v7x)


# ----------------------------------------------------------------------------
# small helpers
# ----------------------------------------------------------------------------
def _round_up(n, m):
    return ((n + m - 1) // m) * m


def _pad_rows(x, rows):
    m = x.shape[0]
    if m == rows:
        return x
    return jnp.pad(x, ((0, rows - m),) + ((0, 0),) * (x.ndim - 1))


# ----------------------------------------------------------------------------
# kernel 1: fused ConvNext block (dwconv -> MLP -> gamma -> residual)
# ----------------------------------------------------------------------------
def _convnext_block_kernel(x_ref, dw_w_ref, dw_b_ref, w1_ref, b1_ref,
                           w2_ref, b2_ref, g_ref, o_ref):
    # x_ref : (T + K - 1, C) zero-padded slab for one batch element
    # dw_w_ref: (K, C) depthwise taps, dw_b_ref: (1, C)
    # w1_ref: (C, H), b1_ref: (1, H), w2_ref: (H, C), b2_ref/g_ref: (1, C)
    # o_ref : (T, C)
    T, _ = o_ref.shape
    K = dw_w_ref.shape[0]
    pad = (K - 1) // 2

    # depthwise conv1d ("same" padding already applied in the wrapper):
    # K is static (7 / 23 / 41) -> unrolled VPU multiply-accumulates.
    w = dw_w_ref[...].astype(jnp.float32)
    conv = jnp.zeros(o_ref.shape, jnp.float32)
    for k in range(K):
        conv = conv + x_ref[pl.ds(k, T), :].astype(jnp.float32) * w[k:k + 1, :]
    conv = conv + dw_b_ref[...].astype(jnp.float32)

    # pointwise MLP on the MXU with f32 accumulation.
    h = jnp.dot(conv, w1_ref[...].astype(jnp.float32),
                preferred_element_type=jnp.float32) + b1_ref[...].astype(jnp.float32)
    # TODO(synk): torch nn.GELU() defaults to the exact erf formulation; the
    # tanh approximation is used here (max abs deviation ~1e-3) for robust
    # Mosaic lowering.
    h = jax.nn.gelu(h, approximate=True)
    y = jnp.dot(h, w2_ref[...].astype(jnp.float32),
                preferred_element_type=jnp.float32) + b2_ref[...].astype(jnp.float32)

    # layer scale + residual (residual = centre of the padded slab: x itself).
    res = x_ref[pl.ds(pad, T), :].astype(jnp.float32)
    o_ref[...] = (y * g_ref[...].astype(jnp.float32) + res).astype(o_ref.dtype)


def convnext_block_pallas(xl, p):
    """xl: (B, T, C) channels-last.  Returns (B, T, C)."""
    B, T, C = xl.shape
    dw_w = p["dw_w"]
    K = dw_w.shape[0]
    pad = (K - 1) // 2
    xp = jnp.pad(xl, ((0, 0), (pad, pad), (0, 0)))
    T_pad = T + 2 * pad
    H = p["w1"].shape[1]
    return pl.pallas_call(
        _convnext_block_kernel,
        out_shape=jax.ShapeDtypeStruct((B, T, C), xl.dtype),
        grid_spec=pltpu.PrefetchScalarGridSpec(
            num_scalar_prefetch=0,
            grid=(B,),
            in_specs=[
                pl.BlockSpec((None, T_pad, C), lambda b: (b, 0, 0)),  # x slab
                pl.BlockSpec((K, C), lambda b: (0, 0)),               # dw taps (resident)
                pl.BlockSpec((1, C), lambda b: (0, 0)),               # dw bias  (resident)
                pl.BlockSpec((C, H), lambda b: (0, 0)),               # W1       (resident)
                pl.BlockSpec((1, H), lambda b: (0, 0)),               # b1       (resident)
                pl.BlockSpec((H, C), lambda b: (0, 0)),               # W2       (resident)
                pl.BlockSpec((1, C), lambda b: (0, 0)),               # b2       (resident)
                pl.BlockSpec((1, C), lambda b: (0, 0)),               # gamma    (resident)
            ],
            out_specs=pl.BlockSpec((None, T, C), lambda b: (b, 0, 0)),
        ),
        compiler_params=pltpu.CompilerParams(
            dimension_semantics=("parallel",),
            vmem_limit_bytes=_VMEM_LIMIT,
        ),
    )(xp, dw_w, p["dw_b"], p["w1"], p["b1"], p["w2"], p["b2"], p["gamma"])


# ----------------------------------------------------------------------------
# kernel 2: downsample conv (im2col patches @ W) + bias + skip add
# ----------------------------------------------------------------------------
def _matmul_bias_skip_kernel(x_ref, w_ref, b_ref, s_ref, o_ref):
    y = jnp.dot(x_ref[...].astype(jnp.float32), w_ref[...].astype(jnp.float32),
                preferred_element_type=jnp.float32)
    y = y + b_ref[...].astype(jnp.float32) + s_ref[...].astype(jnp.float32)
    o_ref[...] = y.astype(o_ref.dtype)


def matmul_bias_skip_pallas(patches, w_flat, bias, skip, tile_rows_max=_TILE_ROWS):
    M, F = patches.shape
    Cout = w_flat.shape[1]
    tile = min(tile_rows_max, _round_up(M, 8))
    Mp = _round_up(M, tile)
    pq = _pad_rows(patches, Mp)
    sq = _pad_rows(skip, Mp)
    out = pl.pallas_call(
        _matmul_bias_skip_kernel,
        out_shape=jax.ShapeDtypeStruct((Mp, Cout), patches.dtype),
        grid_spec=pltpu.PrefetchScalarGridSpec(
            num_scalar_prefetch=0,
            grid=(Mp // tile,),
            in_specs=[
                pl.BlockSpec((tile, F), lambda i: (i, 0)),     # im2col patch rows
                pl.BlockSpec((F, Cout), lambda i: (0, 0)),     # conv weight (resident)
                pl.BlockSpec((1, Cout), lambda i: (0, 0)),     # bias (resident)
                pl.BlockSpec((tile, Cout), lambda i: (i, 0)),  # skip rows
            ],
            out_specs=pl.BlockSpec((tile, Cout), lambda i: (i, 0)),
        ),
        compiler_params=pltpu.CompilerParams(
            dimension_semantics=("parallel",),
            vmem_limit_bytes=_VMEM_LIMIT,
        ),
    )(pq, w_flat, bias, sq)
    return out[:M]


# ----------------------------------------------------------------------------
# module-level forward (channels-first interface like torch)
# ----------------------------------------------------------------------------
def downsample_with_skip(xl, p):
    B, T, Cin = xl.shape
    f, K, avg = p["factor"], p["kernel"], p["avg"]
    Cout = p["b"].shape[1]
    pad = f // 2
    T_out = (T + 2 * pad - K) // f + 1
    xp = jnp.pad(xl, ((0, 0), (pad, pad), (0, 0)))
    # im2col: patches[b, t', k*Cin + c] = x_pad[b, t'*f + k, c]
    cols = [xp[:, k: k + f * (T_out - 1) + 1: f, :] for k in range(K)]
    patches = jnp.concatenate(cols, axis=-1).reshape(B * T_out, K * Cin)
    # skip path: PixelUnshuffle1D is a pure reshape in channels-last layout.
    # TODO(synk): PixelUnshuffle1D source was not provided; the
    # (view -> permute(0,3,1,2) -> view) definition is assumed (matched by the
    # pure-JAX reference below).
    assert T % f == 0, "PixelUnshuffle1D requires T divisible by the factor"
    skip = xl[:, : T_out * f, :].reshape(B, T_out, f * Cin)
    if avg > 1:
        skip = skip.reshape(B, T_out, (f * Cin) // avg, avg).mean(axis=-1)
    skip = skip.reshape(B * T_out, Cout)
    y = matmul_bias_skip_pallas(patches, p["w_flat"], p["b"], skip)
    return y.reshape(B, T_out, Cout)


def encoder_forward(x_cf, params):
    """x_cf: (B, C0, T) channels-first. Returns (x_out, residuals) like torch."""
    x = jnp.transpose(x_cf, (0, 2, 1))  # channels-last (B, T, C)
    residuals = [x_cf]
    for stage in params:
        for blk in stage["convnext"]:
            x = convnext_block_pallas(x, blk)
        x = downsample_with_skip(x, stage["down"])
        residuals.append(jnp.transpose(x, (0, 2, 1)))
    residuals.pop()
    return jnp.transpose(x, (0, 2, 1)), residuals


# ----------------------------------------------------------------------------
# parameter init (deterministic) and pure-JAX reference
# ----------------------------------------------------------------------------
def _init_convnext(key, C, kernel, expansion=4, layer_scale_init=1e-6):
    k1, k2, k3, k4, k5, k6 = jax.random.split(key, 6)
    H = C * expansion
    return dict(
        dw_w=jax.random.normal(k1, (kernel, C), jnp.float32) / (kernel ** 0.5),
        dw_b=jax.random.normal(k2, (1, C), jnp.float32) * 0.05,
        w1=jax.random.normal(k3, (C, H), jnp.float32) / (C ** 0.5),
        b1=jax.random.normal(k4, (1, H), jnp.float32) * 0.05,
        w2=jax.random.normal(k5, (H, C), jnp.float32) / (H ** 0.5),
        b2=jax.random.normal(k6, (1, C), jnp.float32) * 0.05,
        gamma=jnp.full((1, C), layer_scale_init, jnp.float32),
    )


def _init_downsample(key, Cin, Cout, factor, avg):
    kernel = {8: 16, 4: 8, 2: 4}.get(factor, 1)
    k1, k2 = jax.random.split(key)
    return dict(
        w_flat=jax.random.normal(k1, (kernel * Cin, Cout), jnp.float32)
        / ((kernel * Cin) ** 0.5),
        b=jax.random.normal(k2, (1, Cout), jnp.float32) * 0.05,
        factor=factor, kernel=kernel, avg=avg,
    )


def init_encoder_params(key, channels, blocks, factors, scale_vs_channels):
    kernels = [7, 23, 41]
    params = []
    for i in range(len(channels) - 1):
        stage = {"convnext": []}
        for j in range(blocks[i]):
            key, sub = jax.random.split(key)
            stage["convnext"].append(_init_convnext(sub, channels[i], kernels[j]))
        key, sub = jax.random.split(key)
        stage["down"] = _init_downsample(sub, channels[i], channels[i + 1],
                                         factors[i], scale_vs_channels[i])
        params.append(stage)
    return params


def encoder_ref(x_cf, params):
    """Pure-JAX reference mirroring the PyTorch Encoder (channels-first)."""
    hp = jax.lax.Precision.HIGHEST
    x = x_cf
    residuals = [x]
    for stage in params:
        for blk in stage["convnext"]:
            K, C = blk["dw_w"].shape
            w_oik = jnp.transpose(blk["dw_w"], (1, 0))[:, None, :]  # (C,1,K)
            h = jax.lax.conv_general_dilated(
                x, w_oik, window_strides=(1,),
                padding=[((K - 1) // 2, (K - 1) // 2)],
                dimension_numbers=("NCH", "OIH", "NCH"),
                feature_group_count=C, precision=hp)
            h = h + blk["dw_b"].reshape(1, C, 1)
            hl = jnp.transpose(h, (0, 2, 1))
            hl = jnp.dot(hl, blk["w1"], precision=hp) + blk["b1"]
            hl = jax.nn.gelu(hl, approximate=True)
            hl = jnp.dot(hl, blk["w2"], precision=hp) + blk["b2"]
            hl = hl * blk["gamma"]
            x = x + jnp.transpose(hl, (0, 2, 1))
        d = stage["down"]
        f, K, avg = d["factor"], d["kernel"], d["avg"]
        B, Cin, T = x.shape
        Cout = d["b"].shape[1]
        w_oik = jnp.transpose(d["w_flat"].reshape(K, Cin, Cout), (2, 1, 0))
        y = jax.lax.conv_general_dilated(
            x, w_oik, window_strides=(f,), padding=[(f // 2, f // 2)],
            dimension_numbers=("NCH", "OIH", "NCH"), precision=hp)
        y = y + d["b"].reshape(1, Cout, 1)
        res = x.reshape(B, Cin, T // f, f).transpose(0, 3, 1, 2).reshape(B, f * Cin, T // f)
        if avg > 1:
            res = res.reshape(B, (f * Cin) // avg, avg, T // f).mean(axis=2)
        x = y + res
        residuals.append(x)
    residuals.pop()
    return x, residuals


# ----------------------------------------------------------------------------
if __name__ == "__main__":
    key = jax.random.PRNGKey(0)

    # Small Encoder config consistent with the module:
    #   channels=(16,32,32), blocks=(1,2), factors=(2,2), scale_vs_channels=(1,2)
    channels = (16, 32, 32)
    blocks = (1, 2)
    factors = (2, 2)
    scale_vs_channels = (1, 2)
    B, T = 2, 64

    key, kx, kp = jax.random.split(key, 3)
    x = jax.random.normal(kx, (B, channels[0], T), dtype=jnp.float32)
    params = init_encoder_params(kp, channels, blocks, factors, scale_vs_channels)

    y, residuals = encoder_forward(x, params)
    y = jax.block_until_ready(y)
    residuals = [jax.block_until_ready(r) for r in residuals]

    y_ref, res_ref = encoder_ref(x, params)

    assert y.shape == y_ref.shape and y.dtype == y_ref.dtype
    assert jnp.allclose(y, y_ref, atol=1e-3, rtol=1e-3), \
        float(jnp.max(jnp.abs(y - y_ref)))
    assert len(residuals) == len(res_ref)
    for a, b in zip(residuals, res_ref):
        assert a.shape == b.shape
        assert jnp.allclose(a, b, atol=1e-3, rtol=1e-3), \
            float(jnp.max(jnp.abs(a - b)))

    print("KERNEL_OK")
</pallas_src>

<mosaic_0001>
module attributes {stable_mosaic.version = 11 : i64} {
  func.func @_convnext_block_kernel(%arg0: i32, %arg1: memref<1x70x16xf32, #tpu.memory_space<vmem>>, %arg2: memref<7x16xf32, #tpu.memory_space<vmem>>, %arg3: memref<1x16xf32, #tpu.memory_space<vmem>>, %arg4: memref<16x64xf32, #tpu.memory_space<vmem>>, %arg5: memref<1x64xf32, #tpu.memory_space<vmem>>, %arg6: memref<64x16xf32, #tpu.memory_space<vmem>>, %arg7: memref<1x16xf32, #tpu.memory_space<vmem>>, %arg8: memref<1x16xf32, #tpu.memory_space<vmem>>, %arg9: memref<1x64x16xf32, #tpu.memory_space<vmem>>) attributes {dimension_semantics = [#tpu.dimension_semantics<parallel>], iteration_bounds = array<i64: 2>, scalar_prefetch = 0 : i64, scratch_operands = 0 : i64, tpu.core_type = #tpu.core_type<tc>, window_params = [{transform_indices = @transform_0, window_bounds = array<i64: 1, 70, 16>}, {pipeline_mode = #tpu.pipeline_mode<synchronous>, transform_indices = @transform_1, window_bounds = array<i64: 7, 16>}, {pipeline_mode = #tpu.pipeline_mode<synchronous>, transform_indices = @transform_2, window_bounds = array<i64: 1, 16>}, {pipeline_mode = #tpu.pipeline_mode<synchronous>, transform_indices = @transform_3, window_bounds = array<i64: 16, 64>}, {pipeline_mode = #tpu.pipeline_mode<synchronous>, transform_indices = @transform_4, window_bounds = array<i64: 1, 64>}, {pipeline_mode = #tpu.pipeline_mode<synchronous>, transform_indices = @transform_5, window_bounds = array<i64: 64, 16>}, {pipeline_mode = #tpu.pipeline_mode<synchronous>, transform_indices = @transform_6, window_bounds = array<i64: 1, 16>}, {pipeline_mode = #tpu.pipeline_mode<synchronous>, transform_indices = @transform_7, window_bounds = array<i64: 1, 16>}, {transform_indices = @transform_8, window_bounds = array<i64: 1, 64, 16>}]} {
    %c0 = arith.constant 0 : index
    %c0_0 = arith.constant 0 : index
    %0 = vector.load %arg2[%c0, %c0_0] : memref<7x16xf32, #tpu.memory_space<vmem>>, vector<7x16xf32>
    %cst = arith.constant 0.000000e+00 : f32
    %1 = vector.broadcast %cst : f32 to vector<64x16xf32>
    %c0_1 = arith.constant 0 : index
    %c0_2 = arith.constant 0 : index
    %c0_3 = arith.constant 0 : index
    %2 = vector.load %arg1[%c0_1, %c0_2, %c0_3] : memref<1x70x16xf32, #tpu.memory_space<vmem>>, vector<1x64x16xf32>
    %3 = vector.shape_cast %2 : vector<1x64x16xf32> to vector<64x16xf32>
    %4 = vector.extract_strided_slice %0 {offsets = [0, 0], sizes = [1, 16], strides = [1, 1]} : vector<7x16xf32> to vector<1x16xf32>
    %5 = vector.broadcast %4 : vector<1x16xf32> to vector<64x16xf32>
    %6 = arith.mulf %3, %5 : vector<64x16xf32>
    %7 = arith.addf %1, %6 : vector<64x16xf32>
    %c0_4 = arith.constant 0 : index
    %c1 = arith.constant 1 : index
    %c0_5 = arith.constant 0 : index
    %8 = vector.load %arg1[%c0_4, %c1, %c0_5] : memref<1x70x16xf32, #tpu.memory_space<vmem>>, vector<1x64x16xf32>
    %9 = vector.shape_cast %8 : vector<1x64x16xf32> to vector<64x16xf32>
    %10 = vector.extract_strided_slice %0 {offsets = [1, 0], sizes = [1, 16], strides = [1, 1]} : vector<7x16xf32> to vector<1x16xf32>
    %11 = vector.broadcast %10 : vector<1x16xf32> to vector<64x16xf32>
    %12 = arith.mulf %9, %11 : vector<64x16xf32>
    %13 = arith.addf %7, %12 : vector<64x16xf32>
    %c0_6 = arith.constant 0 : index
    %c2 = arith.constant 2 : index
    %c0_7 = arith.constant 0 : index
    %14 = vector.load %arg1[%c0_6, %c2, %c0_7] : memref<1x70x16xf32, #tpu.memory_space<vmem>>, vector<1x64x16xf32>
    %15 = vector.shape_cast %14 : vector<1x64x16xf32> to vector<64x16xf32>
    %16 = vector.extract_strided_slice %0 {offsets = [2, 0], sizes = [1, 16], strides = [1, 1]} : vector<7x16xf32> to vector<1x16xf32>
    %17 = vector.broadcast %16 : vector<1x16xf32> to vector<64x16xf32>
    %18 = arith.mulf %15, %17 : vector<64x16xf32>
    %19 = arith.addf %13, %18 : vector<64x16xf32>
    %c0_8 = arith.constant 0 : index
    %c3 = arith.constant 3 : index
    %c0_9 = arith.constant 0 : index
    %20 = vector.load %arg1[%c0_8, %c3, %c0_9] : memref<1x70x16xf32, #tpu.memory_space<vmem>>, vector<1x64x16xf32>
    %21 = vector.shape_cast %20 : vector<1x64x16xf32> to vector<64x16xf32>
    %22 = vector.extract_strided_slice %0 {offsets = [3, 0], sizes = [1, 16], strides = [1, 1]} : vector<7x16xf32> to vector<1x16xf32>
    %23 = vector.broadcast %22 : vector<1x16xf32> to vector<64x16xf32>
    %24 = arith.mulf %21, %23 : vector<64x16xf32>
    %25 = arith.addf %19, %24 : vector<64x16xf32>
    %c0_10 = arith.constant 0 : index
    %c4 = arith.constant 4 : index
    %c0_11 = arith.constant 0 : index
    %26 = vector.load %arg1[%c0_10, %c4, %c0_11] : memref<1x70x16xf32, #tpu.memory_space<vmem>>, vector<1x64x16xf32>
    %27 = vector.shape_cast %26 : vector<1x64x16xf32> to vector<64x16xf32>
    %28 = vector.extract_strided_slice %0 {offsets = [4, 0], sizes = [1, 16], strides = [1, 1]} : vector<7x16xf32> to vector<1x16xf32>
    %29 = vector.broadcast %28 : vector<1x16xf32> to vector<64x16xf32>
    %30 = arith.mulf %27, %29 : vector<64x16xf32>
    %31 = arith.addf %25, %30 : vector<64x16xf32>
    %c0_12 = arith.constant 0 : index
    %c5 = arith.constant 5 : index
    %c0_13 = arith.constant 0 : index
    %32 = vector.load %arg1[%c0_12, %c5, %c0_13] : memref<1x70x16xf32, #tpu.memory_space<vmem>>, vector<1x64x16xf32>
    %33 = vector.shape_cast %32 : vector<1x64x16xf32> to vector<64x16xf32>
    %34 = vector.extract_strided_slice %0 {offsets = [5, 0], sizes = [1, 16], strides = [1, 1]} : vector<7x16xf32> to vector<1x16xf32>
    %35 = vector.broadcast %34 : vector<1x16xf32> to vector<64x16xf32>
    %36 = arith.mulf %33, %35 : vector<64x16xf32>
    %37 = arith.addf %31, %36 : vector<64x16xf32>
    %c0_14 = arith.constant 0 : index
    %c6 = arith.constant 6 : index
    %c0_15 = arith.constant 0 : index
    %38 = vector.load %arg1[%c0_14, %c6, %c0_15] : memref<1x70x16xf32, #tpu.memory_space<vmem>>, vector<1x64x16xf32>
    %39 = vector.shape_cast %38 : vector<1x64x16xf32> to vector<64x16xf32>
    %40 = vector.extract_strided_slice %0 {offsets = [6, 0], sizes = [1, 16], strides = [1, 1]} : vector<7x16xf32> to vector<1x16xf32>
    %41 = vector.broadcast %40 : vector<1x16xf32> to vector<64x16xf32>
    %42 = arith.mulf %39, %41 : vector<64x16xf32>
    %43 = arith.addf %37, %42 : vector<64x16xf32>
    %c0_16 = arith.constant 0 : index
    %c0_17 = arith.constant 0 : index
    %44 = vector.load %arg3[%c0_16, %c0_17] : memref<1x16xf32, #tpu.memory_space<vmem>>, vector<1x16xf32>
    %45 = vector.broadcast %44 : vector<1x16xf32> to vector<64x16xf32>
    %46 = arith.addf %43, %45 : vector<64x16xf32>
    %c0_18 = arith.constant 0 : index
    %c0_19 = arith.constant 0 : index
    %47 = vector.load %arg4[%c0_18, %c0_19] : memref<16x64xf32, #tpu.memory_space<vmem>>, vector<16x64xf32>
    %cst_20 = arith.constant dense<0.000000e+00> : vector<64x64xf32>
    %48 = tpu.matmul %46, %47, %cst_20 {dimension_numbers = #tpu.dot_dimension_numbers<[1], [0], [0], [1], [0, 0, 1, 1], [], []>} : vector<64x16xf32>, vector<16x64xf32>, vector<64x64xf32> -> vector<64x64xf32>
    %c0_21 = arith.constant 0 : index
    %c0_22 = arith.constant 0 : index
    %49 = vector.load %arg5[%c0_21, %c0_22] : memref<1x64xf32, #tpu.memory_space<vmem>>, vector<1x64xf32>
    %50 = vector.broadcast %49 : vector<1x64xf32> to vector<64x64xf32>
    %51 = arith.addf %48, %50 : vector<64x64xf32>
    %52 = arith.mulf %51, %51 : vector<64x64xf32>
    %53 = arith.mulf %51, %52 : vector<64x64xf32>
    %cst_23 = arith.constant 4.471500e-02 : f32
    %54 = vector.broadcast %cst_23 : f32 to vector<64x64xf32>
    %55 = arith.mulf %54, %53 : vector<64x64xf32>
    %56 = arith.addf %51, %55 : vector<64x64xf32>
    %cst_24 = arith.constant 0.797884583 : f32
    %57 = vector.broadcast %cst_24 : f32 to vector<64x64xf32>
    %58 = arith.mulf %57, %56 : vector<64x64xf32>
    %59 = math.tanh %58 : vector<64x64xf32>
    %cst_25 = arith.constant 1.000000e+00 : f32
    %60 = vector.broadcast %cst_25 : f32 to vector<64x64xf32>
    %61 = arith.addf %60, %59 : vector<64x64xf32>
    %cst_26 = arith.constant 5.000000e-01 : f32
    %62 = vector.broadcast %cst_26 : f32 to vector<64x64xf32>
    %63 = arith.mulf %62, %61 : vector<64x64xf32>
    %64 = arith.mulf %51, %63 : vector<64x64xf32>
    %c0_27 = arith.constant 0 : index
    %c0_28 = arith.constant 0 : index
    %65 = vector.load %arg6[%c0_27, %c0_28] : memref<64x16xf32, #tpu.memory_space<vmem>>, vector<64x16xf32>
    %cst_29 = arith.constant dense<0.000000e+00> : vector<64x16xf32>
    %66 = tpu.matmul %64, %65, %cst_29 {dimension_numbers = #tpu.dot_dimension_numbers<[1], [0], [0], [1], [0, 0, 1, 1], [], []>} : vector<64x64xf32>, vector<64x16xf32>, vector<64x16xf32> -> vector<64x16xf32>
    %c0_30 = arith.constant 0 : index
    %c0_31 = arith.constant 0 : index
    %67 = vector.load %arg7[%c0_30, %c0_31] : memref<1x16xf32, #tpu.memory_space<vmem>>, vector<1x16xf32>
    %68 = vector.broadcast %67 : vector<1x16xf32> to vector<64x16xf32>
    %69 = arith.addf %66, %68 : vector<64x16xf32>
    %c0_32 = arith.constant 0 : index
    %c3_33 = arith.constant 3 : index
    %c0_34 = arith.constant 0 : index
    %70 = vector.load %arg1[%c0_32, %c3_33, %c0_34] : memref<1x70x16xf32, #tpu.memory_space<vmem>>, vector<1x64x16xf32>
    %71 = vector.shape_cast %70 : vector<1x64x16xf32> to vector<64x16xf32>
    %c0_35 = arith.constant 0 : index
    %c0_36 = arith.constant 0 : index
    %72 = vector.load %arg8[%c0_35, %c0_36] : memref<1x16xf32, #tpu.memory_space<vmem>>, vector<1x16xf32>
    %73 = vector.broadcast %72 : vector<1x16xf32> to vector<64x16xf32>
    %74 = arith.mulf %69, %73 : vector<64x16xf32>
    %75 = arith.addf %74, %71 : vector<64x16xf32>
    %c0_37 = arith.constant 0 : index
    %c0_38 = arith.constant 0 : index
    %c0_39 = arith.constant 0 : index
    %76 = vector.load %arg9[%c0_37, %c0_38, %c0_39] : memref<1x64x16xf32, #tpu.memory_space<vmem>>, vector<1x64x16xf32>
    %77 = vector.shape_cast %76 : vector<1x64x16xf32> to vector<64x16xf32>
    %78 = vector.shape_cast %75 : vector<64x16xf32> to vector<1x64x16xf32>
    tpu.vector_store %arg9[%c0_37, %c0_38, %c0_39], %78 {strides = array<i32>} : memref<1x64x16xf32, #tpu.memory_space<vmem>>, vector<1x64x16xf32>,
    return
  }
  func.func @transform_0(%arg0: i32) -> (i32, i32, i32) {
    %c0_i32 = arith.constant 0 : i32
    %c0_i32_0 = arith.constant 0 : i32
    %c0_i32_1 = arith.constant 0 : i32
    return %arg0, %c0_i32, %c0_i32_0 : i32, i32, i32
  }
  func.func @transform_1(%arg0: i32) -> (i32, i32) {
    %c0_i32 = arith.constant 0 : i32
    %c0_i32_0 = arith.constant 0 : i32
    %c0_i32_1 = arith.constant 0 : i32
    return %c0_i32, %c0_i32_0 : i32, i32
  }
  func.func @transform_2(%arg0: i32) -> (i32, i32) {
    %c0_i32 = arith.constant 0 : i32
    %c0_i32_0 = arith.constant 0 : i32
    %c0_i32_1 = arith.constant 0 : i32
    return %c0_i32, %c0_i32_0 : i32, i32
  }
  func.func @transform_3(%arg0: i32) -> (i32, i32) {
    %c0_i32 = arith.constant 0 : i32
    %c0_i32_0 = arith.constant 0 : i32
    %c0_i32_1 = arith.constant 0 : i32
    return %c0_i32, %c0_i32_0 : i32, i32
  }
  func.func @transform_4(%arg0: i32) -> (i32, i32) {
    %c0_i32 = arith.constant 0 : i32
    %c0_i32_0 = arith.constant 0 : i32
    %c0_i32_1 = arith.constant 0 : i32
    return %c0_i32, %c0_i32_0 : i32, i32
  }
  func.func @transform_5(%arg0: i32) -> (i32, i32) {
    %c0_i32 = arith.constant 0 : i32
    %c0_i32_0 = arith.constant 0 : i32
    %c0_i32_1 = arith.constant 0 : i32
    return %c0_i32, %c0_i32_0 : i32, i32
  }
  func.func @transform_6(%arg0: i32) -> (i32, i32) {
    %c0_i32 = arith.constant 0 : i32
    %c0_i32_0 = arith.constant 0 : i32
    %c0_i32_1 = arith.constant 0 : i32
    return %c0_i32, %c0_i32_0 : i32, i32
  }
  func.func @transform_7(%arg0: i32) -> (i32, i32) {
    %c0_i32 = arith.constant 0 : i32
    %c0_i32_0 = arith.constant 0 : i32
    %c0_i32_1 = arith.constant 0 : i32
    return %c0_i32, %c0_i32_0 : i32, i32
  }
  func.func @transform_8(%arg0: i32) -> (i32, i32, i32) {
    %c0_i32 = arith.constant 0 : i32
    %c0_i32_0 = arith.constant 0 : i32
    %c0_i32_1 = arith.constant 0 : i32
    return %arg0, %c0_i32, %c0_i32_0 : i32, i32, i32
  }
}

</mosaic_0001>

<llo_original>
// kernel: tpu_custom_call.1
$region0: #{tpu_custom_call.1}
  #allocation0 [shape = 'u32[]', space=smem, size = 0x4, offset = 0x4, fixed_abs, tag = 'smem constant byte address 0x4 - core index']
  #allocation1 [shape = 'u32[144,128]{1,0:T(1,128)}', space=vmem, size = 0x12000, scoped, tag = 'internal scratch']
  %s0 = inlined_call_operand.vmem [shape: f32[2,70,16], index: 0, kind: input, shape index: {}]
  %s1 = inlined_call_operand.vmem [shape: f32[7,16], index: 1, kind: input, shape index: {}]
  %s2 = inlined_call_operand.vmem [shape: f32[1,16], index: 2, kind: input, shape index: {}]
  %s3 = inlined_call_operand.vmem [shape: f32[16,64], index: 3, kind: input, shape index: {}]
  %s4 = inlined_call_operand.vmem [shape: f32[1,64], index: 4, kind: input, shape index: {}]
  %s5 = inlined_call_operand.vmem [shape: f32[64,16], index: 5, kind: input, shape index: {}]
  %s6 = inlined_call_operand.vmem [shape: f32[1,16], index: 6, kind: input, shape index: {}]
  %s7 = inlined_call_operand.vmem [shape: f32[1,16], index: 7, kind: input, shape index: {}]
  %s8 = inlined_call_operand.vmem [shape: f32[2,64,16], index: 8, kind: output, shape index: {}]
  %s9 = sld [smem:[#allocation0]]
  $region65: #{tpu_custom_call.1} parent=0
    _
  %s11 = ssub.s32 1, %s9
  %s12 = scalar_select 0, %s11, %s9
  loop: start=0, step=1, limit=4
  $region2: #{tpu_custom_call.1} parent=0 // loop_pre_header
    _
  $region3: #{tpu_custom_call.1} parent=0 // loop_header
    %s14 = sphi 0, %s18
    %p15 = scmp.ge.s32.totalorder %s14, 4
    %s24 = sphi 0, %s26
    %s27 = sphi 0, %s24
    %s28 = sphi 0, %s27
    %s44 = sphi 0, %s28
    %s48 = sphi 0, %s48
    %s50 = sphi 0, %s48
    %s51 = sphi 0, %s50
    %s65 = sphi 0, %s51
    %s69 = sphi 0, %s69
    %s71 = sphi 0, %s69
    %s72 = sphi 0, %s71
    %s86 = sphi 0, %s72
    %s90 = sphi 0, %s90
    %s92 = sphi 0, %s90
    %s93 = sphi 0, %s92
    %s107 = sphi 0, %s93
    %s111 = sphi 0, %s111
    %s113 = sphi 0, %s111
    %s114 = sphi 0, %s113
    %s128 = sphi 0, %s114
    %s132 = sphi 0, %s132
    %s134 = sphi 0, %s132
    %s135 = sphi 0, %s134
    %s149 = sphi 0, %s135
    %s153 = sphi 0, %s153
    %s155 = sphi 0, %s153
    %s156 = sphi 0, %s155
    %s170 = sphi 0, %s156
    %s174 = sphi 0, %s174
    %s176 = sphi 0, %s174
    %s177 = sphi 0, %s176
    %s191 = sphi 0, %s177
    %s197 = sphi 0, %s199
    %s200 = sphi 0, %s197
    %s201 = sphi 0, %s200
    %s217 = sphi 0, %s201
  $region4: #{tpu_custom_call.1} parent=0 // loop_header_branch
    %17 = sbr.rel (%p15) target = $region8
  $region5: #{tpu_custom_call.1} parent=0 // loop_body
    %s19 = ssub.s32 %s14, 1
    %s20 = ssub.s32 %s14, 2
    %s21 = sadd.s32 %s14, 1
    %s22 = ssub.s32 %s14, %s21
    %p23 = scmp.eq.s32.totalorder %s22, 0
    %s25 = sadd.s32 %s24, 1
    %s26 = scalar_select %p23, %s24, %s25
    %p29 = pneg %p23
    %p30 = scmp.eq.s32.totalorder %s14, 1
    %p31 = por %p29, %p30
    %p32 = scmp.ne.s32.totalorder %s24, %s27
    %p33 = scmp.eq.s32.totalorder %s14, 0
    %p34 = por %p32, %p33
    %p35 = scmp.ne.s32.totalorder %s24, %s27
    %p36 = scmp.eq.s32.totalorder %s19, 1
    %p37 = por %p35, %p36
    %p38 = scmp.ne.s32.totalorder %s27, %s28
    %p39 = scmp.eq.s32.totalorder %s19, 0
    %p40 = por %p38, %p39
    %p41 = scmp.ne.s32.totalorder %s27, %s28
    %p42 = scmp.eq.s32.totalorder %s20, 1
    %p43 = por %p41, %p42
    %p45 = scmp.ne.s32.totalorder %s28, %s44
    %p46 = scmp.eq.s32.totalorder %s20, 0
    %p47 = por %p45, %p46
    %s49 = sadd.s32 %s48, 1
    %p52 = scmp.eq.s32.totalorder %s14, 1
    %p53 = scmp.ne.s32.totalorder %s48, %s50
    %p54 = scmp.eq.s32.totalorder %s14, 0
    %p55 = por %p53, %p54
    %p56 = scmp.ne.s32.totalorder %s48, %s50
    %p57 = scmp.eq.s32.totalorder %s19, 1
    %p58 = por %p56, %p57
    %p59 = scmp.ne.s32.totalorder %s50, %s51
    %p60 = scmp.eq.s32.totalorder %s19, 0
    %p61 = por %p59, %p60
    %p62 = scmp.ne.s32.totalorder %s50, %s51
    %p63 = scmp.eq.s32.totalorder %s20, 1
    %p64 = por %p62, %p63
    %p66 = scmp.ne.s32.totalorder %s51, %s65
    %p67 = scmp.eq.s32.totalorder %s20, 0
    %p68 = por %p66, %p67
    %s70 = sadd.s32 %s69, 1
    %p73 = scmp.eq.s32.totalorder %s14, 1
    %p74 = scmp.ne.s32.totalorder %s69, %s71
    %p75 = scmp.eq.s32.totalorder %s14, 0
    %p76 = por %p74, %p75
    %p77 = scmp.ne.s32.totalorder %s69, %s71
    %p78 = scmp.eq.s32.totalorder %s19, 1
    %p79 = por %p77, %p78
    %p80 = scmp.ne.s32.totalorder %s71, %s72
    %p81 = scmp.eq.s32.totalorder %s19, 0
    %p82 = por %p80, %p81
    %p83 = scmp.ne.s32.totalorder %s71, %s72
    %p84 = scmp.eq.s32.totalorder %s20, 1
    %p85 = por %p83, %p84
    %p87 = scmp.ne.s32.totalorder %s72, %s86
    %p88 = scmp.eq.s32.totalorder %s20, 0
    %p89 = por %p87, %p88
    %s91 = sadd.s32 %s90, 1
    %p94 = scmp.eq.s32.totalorder %s14, 1
    %p95 = scmp.ne.s32.totalorder %s90, %s92
    %p96 = scmp.eq.s32.totalorder %s14, 0
    %p97 = por %p95, %p96
    %p98 = scmp.ne.s32.totalorder %s90, %s92
    %p99 = scmp.eq.s32.totalorder %s19, 1
    %p100 = por %p98, %p99
    %p101 = scmp.ne.s32.totalorder %s92, %s93
    %p102 = scmp.eq.s32.totalorder %s19, 0
    %p103 = por %p101, %p102
    %p104 = scmp.ne.s32.totalorder %s92, %s93
    %p105 = scmp.eq.s32.totalorder %s20, 1
    %p106 = por %p104, %p105
    %p108 = scmp.ne.s32.totalorder %s93, %s107
    %p109 = scmp.eq.s32.totalorder %s20, 0
    %p110 = por %p108, %p109
    %s112 = sadd.s32 %s111, 1
    %p115 = scmp.eq.s32.totalorder %s14, 1
    %p116 = scmp.ne.s32.totalorder %s111, %s113
    %p117 = scmp.eq.s32.totalorder %s14, 0
    %p118 = por %p116, %p117
    %p119 = scmp.ne.s32.totalorder %s111, %s113
    %p120 = scmp.eq.s32.totalorder %s19, 1
    %p121 = por %p119, %p120
    %p122 = scmp.ne.s32.totalorder %s113, %s114
    %p123 = scmp.eq.s32.totalorder %s19, 0
    %p124 = por %p122, %p123
    %p125 = scmp.ne.s32.totalorder %s113, %s114
    %p126 = scmp.eq.s32.totalorder %s20, 1
    %p127 = por %p125, %p126
    %p129 = scmp.ne.s32.totalorder %s114, %s128
    %p130 = scmp.eq.s32.totalorder %s20, 0
    %p131 = por %p129, %p130
    %s133 = sadd.s32 %s132, 1
    %p136 = scmp.eq.s32.totalorder %s14, 1
    %p137 = scmp.ne.s32.totalorder %s132, %s134
    %p138 = scmp.eq.s32.totalorder %s14, 0
    %p139 = por %p137, %p138
    %p140 = scmp.ne.s32.totalorder %s132, %s134
    %p141 = scmp.eq.s32.totalorder %s19, 1
    %p142 = por %p140, %p141
    %p143 = scmp.ne.s32.totalorder %s134, %s135
    %p144 = scmp.eq.s32.totalorder %s19, 0
    %p145 = por %p143, %p144
    %p146 = scmp.ne.s32.totalorder %s134, %s135
    %p147 = scmp.eq.s32.totalorder %s20, 1
    %p148 = por %p146, %p147
    %p150 = scmp.ne.s32.totalorder %s135, %s149
    %p151 = scmp.eq.s32.totalorder %s20, 0
    %p152 = por %p150, %p151
    %s154 = sadd.s32 %s153, 1
    %p157 = scmp.eq.s32.totalorder %s14, 1
    %p158 = scmp.ne.s32.totalorder %s153, %s155
    %p159 = scmp.eq.s32.totalorder %s14, 0
    %p160 = por %p158, %p159
    %p161 = scmp.ne.s32.totalorder %s153, %s155
    %p162 = scmp.eq.s32.totalorder %s19, 1
    %p163 = por %p161, %p162
    %p164 = scmp.ne.s32.totalorder %s155, %s156
    %p165 = scmp.eq.s32.totalorder %s19, 0
    %p166 = por %p164, %p165
    %p167 = scmp.ne.s32.totalorder %s155, %s156
    %p168 = scmp.eq.s32.totalorder %s20, 1
    %p169 = por %p167, %p168
    %p171 = scmp.ne.s32.totalorder %s156, %s170
    %p172 = scmp.eq.s32.totalorder %s20, 0
    %p173 = por %p171, %p172
    %s175 = sadd.s32 %s174, 1
    %p178 = scmp.eq.s32.totalorder %s14, 1
    %p179 = scmp.ne.s32.totalorder %s174, %s176
    %p180 = scmp.eq.s32.totalorder %s14, 0
    %p181 = por %p179, %p180
    %p182 = scmp.ne.s32.totalorder %s174, %s176
    %p183 = scmp.eq.s32.totalorder %s19, 1
    %p184 = por %p182, %p183
    %p185 = scmp.ne.s32.totalorder %s176, %s177
    %p186 = scmp.eq.s32.totalorder %s19, 0
    %p187 = por %p185, %p186
    %p188 = scmp.ne.s32.totalorder %s176, %s177
    %p189 = scmp.eq.s32.totalorder %s20, 1
    %p190 = por %p188, %p189
    %p192 = scmp.ne.s32.totalorder %s177, %s191
    %p193 = scmp.eq.s32.totalorder %s20, 0
    %p194 = por %p192, %p193
    %s195 = ssub.s32 %s14, %s21
    %p196 = scmp.eq.s32.totalorder %s195, 0
    %s198 = sadd.s32 %s197, 1
    %s199 = scalar_select %p196, %s197, %s198
    %p202 = pneg %p196
    %p203 = scmp.eq.s32.totalorder %s14, 1
    %p204 = por %p202, %p203
    %p205 = scmp.ne.s32.totalorder %s197, %s200
    %p206 = scmp.eq.s32.totalorder %s14, 0
    %p207 = por %p205, %p206
    %p208 = scmp.ne.s32.totalorder %s197, %s200
    %p209 = scmp.eq.s32.totalorder %s19, 1
    %p210 = por %p208, %p209
    %p211 = scmp.ne.s32.totalorder %s200, %s201
    %p212 = scmp.eq.s32.totalorder %s19, 0
    %p213 = por %p211, %p212
    %p214 = scmp.ne.s32.totalorder %s200, %s201
    %p215 = scmp.eq.s32.totalorder %s20, 1
    %p216 = por %p214, %p215
    %p218 = scmp.ne.s32.totalorder %s201, %s217
    %p219 = scmp.eq.s32.totalorder %s20, 0
    %p220 = por %p218, %p219
    %p221 = scmp.le.s32.totalorder 1, %s14
    %p222 = scmp.lt.s32.totalorder %s14, 3
    %p223 = pnand %p221, %p222
    %p224 = pneg %p223
    // Predicated region
    $region9: #{tpu_custom_call.1} parent=5 // pred_check
      _
    $region10: #{tpu_custom_call.1} parent=5 // pred_check_branch
      %226 = sbr.rel (%p223) target = $region12
    $region11: #{tpu_custom_call.1} parent=5 // pred_region
      %s227 = ssub.s32 %s14, 1
      // Predicated region
      $region13: #{tpu_custom_call.1} parent=11 // pred_check
        %p228 = pneg %p61
      $region14: #{tpu_custom_call.1} parent=11 // pred_check_branch
        %230 = sbr.rel (%p228) target = $region16
      $region15: #{tpu_custom_call.1} parent=11 // pred_region
        _
      $region16: #{tpu_custom_call.1} parent=11 // pred_fallthru
        _
      // Predicated region
      $region17: #{tpu_custom_call.1} parent=11 // pred_check
        %p231 = pneg %p82
      $region18: #{tpu_custom_call.1} parent=11 // pred_check_branch
        %233 = sbr.rel (%p231) target = $region20
      $region19: #{tpu_custom_call.1} parent=11 // pred_region
        _
      $region20: #{tpu_custom_call.1} parent=11 // pred_fallthru
        _
      // Predicated region
      $region21: #{tpu_custom_call.1} parent=11 // pred_check
        %p234 = pneg %p103
      $region22: #{tpu_custom_call.1} parent=11 // pred_check_branch
        %236 = sbr.rel (%p234) target = $region24
      $region23: #{tpu_custom_call.1} parent=11 // pred_region
        _
      $region24: #{tpu_custom_call.1} parent=11 // pred_fallthru
        _
      // Predicated region
      $region25: #{tpu_custom_call.1} parent=11 // pred_check
        %p237 = pneg %p124
      $region26: #{tpu_custom_call.1} parent=11 // pred_check_branch
        %239 = sbr.rel (%p237) target = $region28
      $region27: #{tpu_custom_call.1} parent=11 // pred_region
        _
      $region28: #{tpu_custom_call.1} parent=11 // pred_fallthru
        _
      // Predicated region
      $region29: #{tpu_custom_call.1} parent=11 // pred_check
        %p240 = pneg %p145
      $region30: #{tpu_custom_call.1} parent=11 // pred_check_branch
        %242 = sbr.rel (%p240) target = $region32
      $region31: #{tpu_custom_call.1} parent=11 // pred_region
        _
      $region32: #{tpu_custom_call.1} parent=11 // pred_fallthru
        _
      // Predicated region
      $region33: #{tpu_custom_call.1} parent=11 // pred_check
        %p243 = pneg %p166
      $region34: #{tpu_custom_call.1} parent=11 // pred_check_branch
        %245 = sbr.rel (%p243) target = $region36
      $region35: #{tpu_custom_call.1} parent=11 // pred_region
        _
      $region36: #{tpu_custom_call.1} parent=11 // pred_fallthru
        _
      // Predicated region
      $region37: #{tpu_custom_call.1} parent=11 // pred_check
        %p246 = pneg %p187
      $region38: #{tpu_custom_call.1} parent=11 // pred_check_branch
        %248 = sbr.rel (%p246) target = $region40
      $region39: #{tpu_custom_call.1} parent=11 // pred_region
        _
      $region40: #{tpu_custom_call.1} parent=11 // pred_fallthru
        _
    $region12: #{tpu_custom_call.1} parent=5 // pred_fallthru
      _
    %p249 = scmp.lt.s32.totalorder %s14, 2
    // Predicated region
    $region41: #{tpu_custom_call.1} parent=5 // pred_check
      %p250 = pneg %p249
    $region42: #{tpu_custom_call.1} parent=5 // pred_check_branch
      %252 = sbr.rel (%p250) target = $region44
    $region43: #{tpu_custom_call.1} parent=5 // pred_region
      // Predicated region
      $region45: #{tpu_custom_call.1} parent=43 // pred_check
        %p253 = pneg %p34
      $region46: #{tpu_custom_call.1} parent=43 // pred_check_branch
        %255 = sbr.rel (%p253) target = $region48
      $region47: #{tpu_custom_call.1} parent=43 // pred_region
        %p256 = scmp.lt.s32.totalorder %s14, 1
        %s257 = scalar_select %p256, %s14, 1
        %s258 = smul.addr %s257, 9
        %s259 = smul.addr %s258, 8
        %s260 = scalar_lea.vmem %s0, %s259
      $region48: #{tpu_custom_call.1} parent=43 // pred_fallthru
        _
    $region44: #{tpu_custom_call.1} parent=5 // pred_fallthru
      _
    %p261 = scmp.le.s32.totalorder 1, %s14
    %p262 = scmp.lt.s32.totalorder %s14, 3
    %p263 = pnand %p261, %p262
    %p264 = pneg %p263
    // Predicated region
    $region49: #{tpu_custom_call.1} parent=5 // pred_check
      _
    $region50: #{tpu_custom_call.1} parent=5 // pred_check_branch
      %266 = sbr.rel (%p263) target = $region52
    $region51: #{tpu_custom_call.1} parent=5 // pred_region
      %s267 = ssub.s32 %s14, 1
      %p268 = scmp.lt.s32.totalorder %s19, 1
      %s269 = scalar_select %p268, %s19, 1
      %s270 = smul.addr %s269, 9
      %s271 = smul.addr %s270, 8
      %s272 = scalar_lea.vmem %s0, %s271
      %p273 = pneg %p40
      %p274 = pneg %p37
      %p275 = pneg %p61
      %p276 = pneg %p58
      %p277 = pneg %p82
      %p278 = pneg %p79
      %p279 = pneg %p103
      %p280 = pneg %p100
      %p281 = pneg %p124
      %p282 = pneg %p121
      %p283 = pneg %p145
      %p284 = pneg %p142
      %p285 = pneg %p166
      %p286 = pneg %p163
      %p287 = pneg %p187
      %p288 = pneg %p184
      %p289 = pneg %p213
      %p290 = pneg %p210
      %p291 = scmp.lt.s32.totalorder %s19, 1
      %s292 = scalar_select %p291, %s19, 1
      %s293 = smul.addr %s292, 8
      %s294 = smul.addr %s293, 8
      %s295 = scalar_lea.vmem %s8, %s294
      %p296 = scmp.lt.s32.totalorder %s19, 1
      %s297 = scalar_select %p296, %s19, 1
      %s298 = smul.addr %s297, 9
      %s299 = smul.addr %s298, 8
      %s300 = scalar_lea.vmem %s0, %s299
      %p301 = scmp.lt.s32.totalorder %s19, 1
      %s302 = scalar_select %p301, %s19, 1
      %s303 = smul.addr %s302, 8
      %s304 = smul.addr %s303, 8
      %s305 = scalar_lea.vmem %s8, %s304
      %v306 = vld [vmem:[%s1] sm:$0x7f]
      %v307 = vld [vmem:[%s300] sm:$0xff]
      %v308 = vld [vmem:[%s300 + $0x8] sm:$0xff]
      %v309 = vld [vmem:[%s300 + $0x10] sm:$0xff]
      %v310 = vld [vmem:[%s300 + $0x18] sm:$0xff]
      %v311 = vld [vmem:[%s300 + $0x20] sm:$0xff]
      %v312 = vld [vmem:[%s300 + $0x28] sm:$0xff]
      %v313 = vld [vmem:[%s300 + $0x30] sm:$0xff]
      %v314 = vld [vmem:[%s300 + $0x38] sm:$0xff]
      %v315 = vlaneseq
      %v316 = vshrl.u32 %v315, 7
      %v317 = vsub.s32 0, %v316
      %v318 = vrot.slane %v306, %v317
      %v319 = vmul.f32 %v307, %v318
      %v320 = vmul.f32 %v308, %v318
      %v321 = vmul.f32 %v309, %v318
      %v322 = vmul.f32 %v310, %v318
      %v323 = vmul.f32 %v311, %v318
      %v324 = vmul.f32 %v312, %v318
      %v325 = vmul.f32 %v313, %v318
      %v326 = vmul.f32 %v314, %v318
      %v327 = vadd.f32 %v319, 0.0
      %v328 = vadd.f32 %v320, 0.0
      %v329 = vadd.f32 %v321, 0.0
      %v330 = vadd.f32 %v322, 0.0
      %v331 = vadd.f32 %v323, 0.0
      %v332 = vadd.f32 %v324, 0.0
      %v333 = vadd.f32 %v325, 0.0
      %v334 = vadd.f32 %v326, 0.0
      %v335 = vld [vmem:[%s300 + $0x1] sm:$0xff]
      %v336 = vld [vmem:[%s300 + $0x9] sm:$0xff]
      %v337 = vld [vmem:[%s300 + $0x11] sm:$0xff]
      %v338 = vld [vmem:[%s300 + $0x19] sm:$0xff]
      %v339 = vld [vmem:[%s300 + $0x21] sm:$0xff]
      %v340 = vld [vmem:[%s300 + $0x29] sm:$0xff]
      %v341 = vld [vmem:[%s300 + $0x31] sm:$0xff]
      %v342 = vld [vmem:[%s300 + $0x39] sm:$0xff]
      %v343 = vlaneseq
      %v344 = vshrl.u32 %v343, 7
      %v345 = vsub.s32 1, %v344
      %v346 = vrot.slane %v306, %v345
      %v347 = vmul.f32 %v335, %v346
      %v348 = vmul.f32 %v336, %v346
      %v349 = vmul.f32 %v337, %v346
      %v350 = vmul.f32 %v338, %v346
      %v351 = vmul.f32 %v339, %v346
      %v352 = vmul.f32 %v340, %v346
      %v353 = vmul.f32 %v341, %v346
      %v354 = vmul.f32 %v342, %v346
      %v355 = vadd.f32 %v327, %v347
      %v356 = vadd.f32 %v328, %v348
      %v357 = vadd.f32 %v329, %v349
      %v358 = vadd.f32 %v330, %v350
      %v359 = vadd.f32 %v331, %v351
      %v360 = vadd.f32 %v332, %v352
      %v361 = vadd.f32 %v333, %v353
      %v362 = vadd.f32 %v334, %v354
      %v363 = vld [vmem:[%s300 + $0x2] sm:$0xff]
      %v364 = vld [vmem:[%s300 + $0xa] sm:$0xff]
      %v365 = vld [vmem:[%s300 + $0x12] sm:$0xff]
      %v366 = vld [vmem:[%s300 + $0x1a] sm:$0xff]
      %v367 = vld [vmem:[%s300 + $0x22] sm:$0xff]
      %v368 = vld [vmem:[%s300 + $0x2a] sm:$0xff]
      %v369 = vld [vmem:[%s300 + $0x32] sm:$0xff]
      %v370 = vld [vmem:[%s300 + $0x3a] sm:$0xff]
      %v371 = vlaneseq
      %v372 = vshrl.u32 %v371, 7
      %v373 = vsub.s32 2, %v372
      %v374 = vrot.slane %v306, %v373
      %v375 = vmul.f32 %v363, %v374
      %v376 = vmul.f32 %v364, %v374
      %v377 = vmul.f32 %v365, %v374
      %v378 = vmul.f32 %v366, %v374
      %v379 = vmul.f32 %v367, %v374
      %v380 = vmul.f32 %v368, %v374
      %v381 = vmul.f32 %v369, %v374
      %v382 = vmul.f32 %v370, %v374
      %v383 = vadd.f32 %v355, %v375
      %v384 = vadd.f32 %v356, %v376
      %v385 = vadd.f32 %v357, %v377
      %v386 = vadd.f32 %v358, %v378
      %v387 = vadd.f32 %v359, %v379
      %v388 = vadd.f32 %v360, %v380
      %v389 = vadd.f32 %v361, %v381
      %v390 = vadd.f32 %v362, %v382
      %v391 = vld [vmem:[%s300 + $0x3] sm:$0xff]
      %v392 = vld [vmem:[%s300 + $0xb] sm:$0xff]
      %v393 = vld [vmem:[%s300 + $0x13] sm:$0xff]
      %v394 = vld [vmem:[%s300 + $0x1b] sm:$0xff]
      %v395 = vld [vmem:[%s300 + $0x23] sm:$0xff]
      %v396 = vld [vmem:[%s300 + $0x2b] sm:$0xff]
      %v397 = vld [vmem:[%s300 + $0x33] sm:$0xff]
      %v398 = vld [vmem:[%s300 + $0x3b] sm:$0xff]
      %v399 = vlaneseq
      %v400 = vshrl.u32 %v399, 7
      %v401 = vsub.s32 3, %v400
      %v402 = vrot.slane %v306, %v401
      %v403 = vmul.f32 %v391, %v402
      %v404 = vmul.f32 %v392, %v402
      %v405 = vmul.f32 %v393, %v402
      %v406 = vmul.f32 %v394, %v402
      %v407 = vmul.f32 %v395, %v402
      %v408 = vmul.f32 %v396, %v402
      %v409 = vmul.f32 %v397, %v402
      %v410 = vmul.f32 %v398, %v402
      %v411 = vadd.f32 %v383, %v403
      %v412 = vadd.f32 %v384, %v404
      %v413 = vadd.f32 %v385, %v405
      %v414 = vadd.f32 %v386, %v406
      %v415 = vadd.f32 %v387, %v407
      %v416 = vadd.f32 %v388, %v408
      %v417 = vadd.f32 %v389, %v409
      %v418 = vadd.f32 %v390, %v410
      %v419 = vld [vmem:[%s300 + $0x4] sm:$0xff]
      %v420 = vld [vmem:[%s300 + $0xc] sm:$0xff]
      %v421 = vld [vmem:[%s300 + $0x14] sm:$0xff]
      %v422 = vld [vmem:[%s300 + $0x1c] sm:$0xff]
      %v423 = vld [vmem:[%s300 + $0x24] sm:$0xff]
      %v424 = vld [vmem:[%s300 + $0x2c] sm:$0xff]
      %v425 = vld [vmem:[%s300 + $0x34] sm:$0xff]
      %v426 = vld [vmem:[%s300 + $0x3c] sm:$0xff]
      %v427 = vlaneseq
      %v428 = vshrl.u32 %v427, 7
      %v429 = vsub.s32 4, %v428
      %v430 = vrot.slane %v306, %v429
      %v431 = vmul.f32 %v419, %v430
      %v432 = vmul.f32 %v420, %v430
      %v433 = vmul.f32 %v421, %v430
      %v434 = vmul.f32 %v422, %v430
      %v435 = vmul.f32 %v423, %v430
      %v436 = vmul.f32 %v424, %v430
      %v437 = vmul.f32 %v425, %v430
      %v438 = vmul.f32 %v426, %v430
      %v439 = vadd.f32 %v411, %v431
      %v440 = vadd.f32 %v412, %v432
      %v441 = vadd.f32 %v413, %v433
      %v442 = vadd.f32 %v414, %v434
      %v443 = vadd.f32 %v415, %v435
      %v444 = vadd.f32 %v416, %v436
      %v445 = vadd.f32 %v417, %v437
      %v446 = vadd.f32 %v418, %v438
      %v447 = vld [vmem:[%s300 + $0x5] sm:$0xff]
      %v448 = vld [vmem:[%s300 + $0xd] sm:$0xff]
      %v449 = vld [vmem:[%s300 + $0x15] sm:$0xff]
      %v450 = vld [vmem:[%s300 + $0x1d] sm:$0xff]
      %v451 = vld [vmem:[%s300 + $0x25] sm:$0xff]
      %v452 = vld [vmem:[%s300 + $0x2d] sm:$0xff]
      %v453 = vld [vmem:[%s300 + $0x35] sm:$0xff]
      %v454 = vld [vmem:[%s300 + $0x3d] sm:$0xff]
      %v455 = vlaneseq
      %v456 = vshrl.u32 %v455, 7
      %v457 = vsub.s32 5, %v456
      %v458 = vrot.slane %v306, %v457
      %v459 = vmul.f32 %v447, %v458
      %v460 = vmul.f32 %v448, %v458
      %v461 = vmul.f32 %v449, %v458
      %v462 = vmul.f32 %v450, %v458
      %v463 = vmul.f32 %v451, %v458
      %v464 = vmul.f32 %v452, %v458
      %v465 = vmul.f32 %v453, %v458
      %v466 = vmul.f32 %v454, %v458
      %v467 = vadd.f32 %v439, %v459
      %v468 = vadd.f32 %v440, %v460
      %v469 = vadd.f32 %v441, %v461
      %v470 = vadd.f32 %v442, %v462
      %v471 = vadd.f32 %v443, %v463
      %v472 = vadd.f32 %v444, %v464
      %v473 = vadd.f32 %v445, %v465
      %v474 = vadd.f32 %v446, %v466
      %v475 = vld [vmem:[%s300 + $0x6] sm:$0xff]
      %v476 = vld [vmem:[%s300 + $0xe] sm:$0xff]
      %v477 = vld [vmem:[%s300 + $0x16] sm:$0xff]
      %v478 = vld [vmem:[%s300 + $0x1e] sm:$0xff]
      %v479 = vld [vmem:[%s300 + $0x26] sm:$0xff]
      %v480 = vld [vmem:[%s300 + $0x2e] sm:$0xff]
      %v481 = vld [vmem:[%s300 + $0x36] sm:$0xff]
      %v482 = vld [vmem:[%s300 + $0x3e] sm:$0xff]
      %v483 = vlaneseq
      %v484 = vshrl.u32 %v483, 7
      %v485 = vsub.s32 6, %v484
      %v486 = vrot.slane %v306, %v485
      %v487 = vmul.f32 %v475, %v486
      %v488 = vmul.f32 %v476, %v486
      %v489 = vmul.f32 %v477, %v486
      %v490 = vmul.f32 %v478, %v486
      %v491 = vmul.f32 %v479, %v486
      %v492 = vmul.f32 %v480, %v486
      %v493 = vmul.f32 %v481, %v486
      %v494 = vmul.f32 %v482, %v486
      %v495 = vadd.f32 %v467, %v487
      %v496 = vadd.f32 %v468, %v488
      %v497 = vadd.f32 %v469, %v489
      %v498 = vadd.f32 %v470, %v490
      %v499 = vadd.f32 %v471, %v491
      %v500 = vadd.f32 %v472, %v492
      %v501 = vadd.f32 %v473, %v493
      %v502 = vadd.f32 %v474, %v494
      %v503 = vld [vmem:[%s2] sm:$0x1]
      %v505 = vlaneseq
      %v506 = vshrl.u32 %v505, 7
      %v507 = vsub.s32 0, %v506
      %v508 = vrot.slane %v503, %v507
      %v510 = vadd.f32 %v495, %v508
      %v511 = vadd.f32 %v496, %v508
      %v512 = vadd.f32 %v497, %v508
      %v513 = vadd.f32 %v498, %v508
      %v514 = vadd.f32 %v499, %v508
      %v515 = vadd.f32 %v500, %v508
      %v516 = vadd.f32 %v501, %v508
      %v517 = vadd.f32 %v502, %v508
      %v518 = vld [vmem:[%s3] sm:$0xff]
      %v519 = vld [vmem:[%s3 + $0x8] sm:$0xff]
      %v520 = vld [vmem:[%s4] sm:$0x1]
      %v522 = vlaneseq
      %v523 = vshrl.u32 %v522, 7
      %v524 = vsub.s32 0, %v523
      %v525 = vrot.slane %v520, %v524
      %vm527 = vcmask 130048
      %v529 = vsel %vm527, %v510, 0
      %v532 = vsel %vm527, %v511, 0
      %v535 = vsel %vm527, %v512, 0
      %v538 = vsel %vm527, %v513, 0
      %v541 = vsel %vm527, %v514, 0
      %v544 = vsel %vm527, %v515, 0
      %v547 = vsel %vm527, %v516, 0
      %v550 = vsel %vm527, %v517, 0
      %552 = vmatprep.subr.mxu0 0.0
      %553 = vmatpush1.msra.mxu0 0.0
      %554 = vmatprep.subr.mxu0 0.0
      %555 = vmatpush1.msra.mxu0 0.0
      %556 = vmatprep.subr.mxu0 0.0
      %557 = vmatpush1.msra.mxu0 0.0
      %558 = vmatprep.subr.mxu0 0.0
      %559 = vmatpush1.msra.mxu0 0.0
      %560 = vmatprep.subr.mxu0 0.0
      %561 = vmatpush1.msra.mxu0 0.0
      %562 = vmatprep.subr.mxu0 0.0
      %563 = vmatpush1.msra.mxu0 0.0
      %564 = vmatprep.subr.mxu0 0.0
      %565 = vmatpush1.msra.mxu0 0.0
      %566 = vmatprep.subr.mxu0 0.0
      %567 = vmatpush1.msra.mxu0 0.0
      %568 = vmatprep.subr.mxu0 0.0
      %569 = vmatpush1.msra.mxu0 0.0
      %570 = vmatprep.subr.mxu0 0.0
      %571 = vmatpush1.msra.mxu0 0.0
      %572 = vmatprep.subr.mxu0 0.0
      %573 = vmatpush1.msra.mxu0 0.0
      %574 = vmatprep.subr.mxu0 0.0
      %575 = vmatpush1.msra.mxu0 0.0
      %576 = vmatprep.subr.mxu0 0.0
      %577 = vmatpush1.msra.mxu0 0.0
      %578 = vmatprep.subr.mxu0 0.0
      %579 = vmatpush1.msra.mxu0 0.0
      %580 = vmatprep.subr.mxu0 0.0
      %581 = vmatpush1.msra.mxu0 %v519
      %582 = vmatprep.subr.mxu0 0.0
      %583 = vmatpush1.msra.mxu0 %v518
      %584 = vmatprep.subr.mxu0 0.0
      %585 = vmatpush2.msra.mxu0 0.0
      %586 = vmatprep.subr.mxu0 0.0
      %587 = vmatpush2.msra.mxu0 0.0
      %588 = vmatprep.subr.mxu0 0.0
      %589 = vmatpush2.msra.mxu0 0.0
      %590 = vmatprep.subr.mxu0 0.0
      %591 = vmatpush2.msra.mxu0 0.0
      %592 = vmatprep.subr.mxu0 0.0
      %593 = vmatpush2.msra.mxu0 0.0
      %594 = vmatprep.subr.mxu0 0.0
      %595 = vmatpush2.msra.mxu0 0.0
      %596 = vmatprep.subr.mxu0 0.0
      %597 = vmatpush2.msra.mxu0 0.0
      %598 = vmatprep.subr.mxu0 0.0
      %599 = vmatpush2.msra.mxu0 0.0
      %600 = vmatprep.subr.mxu0 0.0
      %601 = vmatpush2.msra.mxu0 0.0
      %602 = vmatprep.subr.mxu0 0.0
      %603 = vmatpush2.msra.mxu0 0.0
      %604 = vmatprep.subr.mxu0 0.0
      %605 = vmatpush2.msra.mxu0 0.0
      %606 = vmatprep.subr.mxu0 0.0
      %607 = vmatpush2.msra.mxu0 0.0
      %608 = vmatprep.subr.mxu0 0.0
      %609 = vmatpush2.msra.mxu0 0.0
      %610 = vmatprep.subr.mxu0 0.0
      %611 = vmatpush2.msra.mxu0 0.0
      %612 = vmatprep.subr.mxu0 0.0
      %613 = vmatpush2.msra.mxu0 0.0
      %614 = vmatprep.subr.mxu0 0.0
      %615 = vmatpush2.msra.mxu0 0.0
      %616 = vmatprep.mubr.f32.mxu0 0.0
      %617 = vmatmul.mubr.f32.gmra.mxu0 %v529
      %v618 = vpop.f32.mrf.mxu0
      %v619 = vadd.f32 %v525, %v618
      %v620 = vpop.f32.mrf.mxu0
      %621 = vmatprep.mubr.f32.mxu0 0.0
      %622 = vmatmul.mubr.f32.gmra.mxu0 %v532
      %v623 = vpop.f32.mrf.mxu0
      %v624 = vadd.f32 %v525, %v623
      %v625 = vpop.f32.mrf.mxu0
      %626 = vmatprep.mubr.f32.mxu0 0.0
      %627 = vmatmul.mubr.f32.gmra.mxu0 %v535
      %v628 = vpop.f32.mrf.mxu0
      %v629 = vadd.f32 %v525, %v628
      %v630 = vpop.f32.mrf.mxu0
      %631 = vmatprep.mubr.f32.mxu0 0.0
      %632 = vmatmul.mubr.f32.gmra.mxu0 %v538
      %v633 = vpop.f32.mrf.mxu0
      %v634 = vadd.f32 %v525, %v633
      %v635 = vpop.f32.mrf.mxu0
      %636 = vmatprep.mubr.f32.mxu0 0.0
      %637 = vmatmul.mubr.f32.gmra.mxu0 %v541
      %v638 = vpop.f32.mrf.mxu0
      %v639 = vadd.f32 %v525, %v638
      %v640 = vpop.f32.mrf.mxu0
      %641 = vmatprep.mubr.f32.mxu0 0.0
      %642 = vmatmul.mubr.f32.gmra.mxu0 %v544
      %v643 = vpop.f32.mrf.mxu0
      %v644 = vadd.f32 %v525, %v643
      %v645 = vpop.f32.mrf.mxu0
      %646 = vmatprep.mubr.f32.mxu0 0.0
      %647 = vmatmul.mubr.f32.gmra.mxu0 %v547
      %v648 = vpop.f32.mrf.mxu0
      %v649 = vadd.f32 %v525, %v648
      %v650 = vpop.f32.mrf.mxu0
      %651 = vmatprep.mubr.f32.mxu0 0.0
      %652 = vmatmul.mubr.f32.gmra.mxu0 %v550
      %v653 = vpop.f32.mrf.mxu0
      %v654 = vadd.f32 %v525, %v653
      %v655 = vpop.f32.mrf.mxu0
      %656 = vdwg.mxu0
      %v657 = vmul.f32 %v619, %v619
      %v658 = vmul.f32 %v624, %v624
      %v659 = vmul.f32 %v629, %v629
      %v660 = vmul.f32 %v634, %v634
      %v661 = vmul.f32 %v639, %v639
      %v662 = vmul.f32 %v644, %v644
      %v663 = vmul.f32 %v649, %v649
      %v664 = vmul.f32 %v654, %v654
      %v665 = vmul.f32 %v619, %v657
      %v666 = vmul.f32 %v624, %v658
      %v667 = vmul.f32 %v629, %v659
      %v668 = vmul.f32 %v634, %v660
      %v669 = vmul.f32 %v639, %v661
      %v670 = vmul.f32 %v644, %v662
      %v671 = vmul.f32 %v649, %v663
      %v672 = vmul.f32 %v654, %v664
      %v673 = vmul.f32 %v665, 0.044715
      %v674 = vmul.f32 %v666, 0.044715
      %v675 = vmul.f32 %v667, 0.044715
      %v676 = vmul.f32 %v668, 0.044715
      %v677 = vmul.f32 %v669, 0.044715
      %v678 = vmul.f32 %v670, 0.044715
      %v679 = vmul.f32 %v671, 0.044715
      %v680 = vmul.f32 %v672, 0.044715
      %v681 = vadd.f32 %v619, %v673
      %v682 = vadd.f32 %v624, %v674
      %v683 = vadd.f32 %v629, %v675
      %v684 = vadd.f32 %v634, %v676
      %v685 = vadd.f32 %v639, %v677
      %v686 = vadd.f32 %v644, %v678
      %v687 = vadd.f32 %v649, %v679
      %v688 = vadd.f32 %v654, %v680
      %v689 = vmul.f32 %v681, 0.7978846
      %v690 = vmul.f32 %v682, 0.7978846
      %v691 = vmul.f32 %v683, 0.7978846
      %v692 = vmul.f32 %v684, 0.7978846
      %v693 = vmul.f32 %v685, 0.7978846
      %v694 = vmul.f32 %v686, 0.7978846
      %v695 = vmul.f32 %v687, 0.7978846
      %v696 = vmul.f32 %v688, 0.7978846
      %v697 = vtanh.pop %v689
      %v698 = vtanh.pop %v690
      %v699 = vtanh.pop %v691
      %v700 = vtanh.pop %v692
      %v701 = vtanh.pop %v693
      %v702 = vtanh.pop %v694
      %v703 = vtanh.pop %v695
      %v704 = vtanh.pop %v696
      %v705 = vadd.f32 %v697, 1.0
      %v706 = vadd.f32 %v698, 1.0
      %v707 = vadd.f32 %v699, 1.0
      %v708 = vadd.f32 %v700, 1.0
      %v709 = vadd.f32 %v701, 1.0
      %v710 = vadd.f32 %v702, 1.0
      %v711 = vadd.f32 %v703, 1.0
      %v712 = vadd.f32 %v704, 1.0
      %v713 = vmul.f32 %v705, 0.5
      %v714 = vmul.f32 %v706, 0.5
      %v715 = vmul.f32 %v707, 0.5
      %v716 = vmul.f32 %v708, 0.5
      %v717 = vmul.f32 %v709, 0.5
      %v718 = vmul.f32 %v710, 0.5
      %v719 = vmul.f32 %v711, 0.5
      %v720 = vmul.f32 %v712, 0.5
      %v721 = vmul.f32 %v619, %v713
      %v722 = vmul.f32 %v624, %v714
      %v723 = vmul.f32 %v629, %v715
      %v724 = vmul.f32 %v634, %v716
      %v725 = vmul.f32 %v639, %v717
      %v726 = vmul.f32 %v644, %v718
      %v727 = vmul.f32 %v649, %v719
      %v728 = vmul.f32 %v654, %v720
      %v729 = vld [vmem:[%s5] sm:$0xff]
      %v730 = vld [vmem:[%s5 + $0x8] sm:$0xff]
      %v731 = vld [vmem:[%s5 + $0x10] sm:$0xff]
      %v732 = vld [vmem:[%s5 + $0x18] sm:$0xff]
      %v733 = vld [vmem:[%s5 + $0x20] sm:$0xff]
      %v734 = vld [vmem:[%s5 + $0x28] sm:$0xff]
      %v735 = vld [vmem:[%s5 + $0x30] sm:$0xff]
      %v736 = vld [vmem:[%s5 + $0x38] sm:$0xff]
      %v737 = vld [vmem:[%s6] sm:$0x1]
      %v739 = vlaneseq
      %v740 = vshrl.u32 %v739, 7
      %v741 = vsub.s32 0, %v740
      %v742 = vrot.slane %v737, %v741
      %vm744 = vcmask 523264
      %v746 = vsel %vm744, %v721, 0
      %v749 = vsel %vm744, %v722, 0
      %v752 = vsel %vm744, %v723, 0
      %v755 = vsel %vm744, %v724, 0
      %v758 = vsel %vm744, %v725, 0
      %v761 = vsel %vm744, %v726, 0
      %v764 = vsel %vm744, %v727, 0
      %v767 = vsel %vm744, %v728, 0
      %769 = vmatprep.subr.mxu0 0.0
      %770 = vmatpush1.msra.mxu0 0.0
      %771 = vmatprep.subr.mxu0 0.0
      %772 = vmatpush1.msra.mxu0 0.0
      %773 = vmatprep.subr.mxu0 0.0
      %774 = vmatpush1.msra.mxu0 0.0
      %775 = vmatprep.subr.mxu0 0.0
      %776 = vmatpush1.msra.mxu0 0.0
      %777 = vmatprep.subr.mxu0 0.0
      %778 = vmatpush1.msra.mxu0 0.0
      %779 = vmatprep.subr.mxu0 0.0
      %780 = vmatpush1.msra.mxu0 0.0
      %781 = vmatprep.subr.mxu0 0.0
      %782 = vmatpush1.msra.mxu0 0.0
      %783 = vmatprep.subr.mxu0 0.0
      %784 = vmatpush1.msra.mxu0 0.0
      %785 = vmatprep.subr.mxu0 0.0
      %786 = vmatpush1.msra.mxu0 %v736
      %787 = vmatprep.subr.mxu0 0.0
      %788 = vmatpush1.msra.mxu0 %v735
      %789 = vmatprep.subr.mxu0 0.0
      %790 = vmatpush1.msra.mxu0 %v734
      %791 = vmatprep.subr.mxu0 0.0
      %792 = vmatpush1.msra.mxu0 %v733
      %793 = vmatprep.subr.mxu0 0.0
      %794 = vmatpush1.msra.mxu0 %v732
      %795 = vmatprep.subr.mxu0 0.0
      %796 = vmatpush1.msra.mxu0 %v731
      %797 = vmatprep.subr.mxu0 0.0
      %798 = vmatpush1.msra.mxu0 %v730
      %799 = vmatprep.subr.mxu0 0.0
      %800 = vmatpush1.msra.mxu0 %v729
      %801 = vmatprep.subr.mxu0 0.0
      %802 = vmatpush2.msra.mxu0 0.0
      %803 = vmatprep.subr.mxu0 0.0
      %804 = vmatpush2.msra.mxu0 0.0
      %805 = vmatprep.subr.mxu0 0.0
      %806 = vmatpush2.msra.mxu0 0.0
      %807 = vmatprep.subr.mxu0 0.0
      %808 = vmatpush2.msra.mxu0 0.0
      %809 = vmatprep.subr.mxu0 0.0
      %810 = vmatpush2.msra.mxu0 0.0
      %811 = vmatprep.subr.mxu0 0.0
      %812 = vmatpush2.msra.mxu0 0.0
      %813 = vmatprep.subr.mxu0 0.0
      %814 = vmatpush2.msra.mxu0 0.0
      %815 = vmatprep.subr.mxu0 0.0
      %816 = vmatpush2.msra.mxu0 0.0
      %817 = vmatprep.subr.mxu0 0.0
      %818 = vmatpush2.msra.mxu0 0.0
      %819 = vmatprep.subr.mxu0 0.0
      %820 = vmatpush2.msra.mxu0 0.0
      %821 = vmatprep.subr.mxu0 0.0
      %822 = vmatpush2.msra.mxu0 0.0
      %823 = vmatprep.subr.mxu0 0.0
      %824 = vmatpush2.msra.mxu0 0.0
      %825 = vmatprep.subr.mxu0 0.0
      %826 = vmatpush2.msra.mxu0 0.0
      %827 = vmatprep.subr.mxu0 0.0
      %828 = vmatpush2.msra.mxu0 0.0
      %829 = vmatprep.subr.mxu0 0.0
      %830 = vmatpush2.msra.mxu0 0.0
      %831 = vmatprep.subr.mxu0 0.0
      %832 = vmatpush2.msra.mxu0 0.0
      %833 = vmatprep.mubr.f32.mxu0 0.0
      %834 = vmatmul.mubr.f32.gmra.mxu0 %v746
      %v835 = vpop.f32.mrf.mxu0
      %v836 = vadd.f32 %v742, %v835
      %v837 = vpop.f32.mrf.mxu0
      %838 = vmatprep.mubr.f32.mxu0 0.0
      %839 = vmatmul.mubr.f32.gmra.mxu0 %v749
      %v840 = vpop.f32.mrf.mxu0
      %v841 = vadd.f32 %v742, %v840
      %v842 = vpop.f32.mrf.mxu0
      %843 = vmatprep.mubr.f32.mxu0 0.0
      %844 = vmatmul.mubr.f32.gmra.mxu0 %v752
      %v845 = vpop.f32.mrf.mxu0
      %v846 = vadd.f32 %v742, %v845
      %v847 = vpop.f32.mrf.mxu0
      %848 = vmatprep.mubr.f32.mxu0 0.0
      %849 = vmatmul.mubr.f32.gmra.mxu0 %v755
      %v850 = vpop.f32.mrf.mxu0
      %v851 = vadd.f32 %v742, %v850
      %v852 = vpop.f32.mrf.mxu0
      %853 = vmatprep.mubr.f32.mxu0 0.0
      %854 = vmatmul.mubr.f32.gmra.mxu0 %v758
      %v855 = vpop.f32.mrf.mxu0
      %v856 = vadd.f32 %v742, %v855
      %v857 = vpop.f32.mrf.mxu0
      %858 = vmatprep.mubr.f32.mxu0 0.0
      %859 = vmatmul.mubr.f32.gmra.mxu0 %v761
      %v860 = vpop.f32.mrf.mxu0
      %v861 = vadd.f32 %v742, %v860
      %v862 = vpop.f32.mrf.mxu0
      %863 = vmatprep.mubr.f32.mxu0 0.0
      %864 = vmatmul.mubr.f32.gmra.mxu0 %v764
      %v865 = vpop.f32.mrf.mxu0
      %v866 = vadd.f32 %v742, %v865
      %v867 = vpop.f32.mrf.mxu0
      %868 = vmatprep.mubr.f32.mxu0 0.0
      %869 = vmatmul.mubr.f32.gmra.mxu0 %v767
      %v870 = vpop.f32.mrf.mxu0
      %v871 = vadd.f32 %v742, %v870
      %v872 = vpop.f32.mrf.mxu0
      %873 = vdwg.mxu0
      %v874 = vld [vmem:[%s7] sm:$0x1]
      %v876 = vlaneseq
      %v877 = vshrl.u32 %v876, 7
      %v878 = vsub.s32 0, %v877
      %v879 = vrot.slane %v874, %v878
      %v881 = vmul.f32 %v836, %v879
      %v882 = vmul.f32 %v841, %v879
      %v883 = vmul.f32 %v846, %v879
      %v884 = vmul.f32 %v851, %v879
      %v885 = vmul.f32 %v856, %v879
      %v886 = vmul.f32 %v861, %v879
      %v887 = vmul.f32 %v866, %v879
      %v888 = vmul.f32 %v871, %v879
      %v889 = vadd.f32 %v881, %v391
      %v890 = vadd.f32 %v882, %v392
      %v891 = vadd.f32 %v883, %v393
      %v892 = vadd.f32 %v884, %v394
      %v893 = vadd.f32 %v885, %v395
      %v894 = vadd.f32 %v886, %v396
      %v895 = vadd.f32 %v887, %v397
      %v896 = vadd.f32 %v888, %v398
      %897 = vst.msk [vmem:[%s305] sm:$0xff] %vm527, %v889
      %898 = vst.msk [vmem:[%s305 + $0x8] sm:$0xff] %vm527, %v890
      %899 = vst.msk [vmem:[%s305 + $0x10] sm:$0xff] %vm527, %v891
      %900 = vst.msk [vmem:[%s305 + $0x18] sm:$0xff] %vm527, %v892
      %901 = vst.msk [vmem:[%s305 + $0x20] sm:$0xff] %vm527, %v893
      %902 = vst.msk [vmem:[%s305 + $0x28] sm:$0xff] %vm527, %v894
      %903 = vst.msk [vmem:[%s305 + $0x30] sm:$0xff] %vm527, %v895
      %904 = vst.msk [vmem:[%s305 + $0x38] sm:$0xff] %vm527, %v896
      %p905 = scmp.lt.s32.totalorder %s19, 1
      %s906 = scalar_select %p905, %s19, 1
      %s907 = smul.addr %s906, 8
      %s908 = smul.addr %s907, 8
      %s909 = scalar_lea.vmem %s8, %s908
      // Predicated region
      $region53: #{tpu_custom_call.1} parent=51 // pred_check
        %p910 = pneg %p210
      $region54: #{tpu_custom_call.1} parent=51 // pred_check_branch
        %912 = sbr.rel (%p910) target = $region56
      $region55: #{tpu_custom_call.1} parent=51 // pred_region
        _
      $region56: #{tpu_custom_call.1} parent=51 // pred_fallthru
        _
    $region52: #{tpu_custom_call.1} parent=5 // pred_fallthru
      _
    %p913 = scmp.le.s32.totalorder 2, %s14
    // Predicated region
    $region57: #{tpu_custom_call.1} parent=5 // pred_check
      %p914 = pneg %p913
    $region58: #{tpu_custom_call.1} parent=5 // pred_check_branch
      %916 = sbr.rel (%p914) target = $region60
    $region59: #{tpu_custom_call.1} parent=5 // pred_region
      %s917 = ssub.s32 %s14, 2
      // Predicated region
      $region61: #{tpu_custom_call.1} parent=59 // pred_check
        %p918 = pneg %p216
      $region62: #{tpu_custom_call.1} parent=59 // pred_check_branch
        %920 = sbr.rel (%p918) target = $region64
      $region63: #{tpu_custom_call.1} parent=59 // pred_region
        %p921 = scmp.lt.s32.totalorder %s20, 1
        %s922 = scalar_select %p921, %s20, 1
        %s923 = smul.addr %s922, 8
        %s924 = smul.addr %s923, 8
        %s925 = scalar_lea.vmem %s8, %s924
      $region64: #{tpu_custom_call.1} parent=59 // pred_fallthru
        _
    $region60: #{tpu_custom_call.1} parent=5 // pred_fallthru
      _
  $region6: #{tpu_custom_call.1} parent=0 // loop_footer
    %s18 = sadd.s32 1, %s14
  $region7: #{tpu_custom_call.1} parent=0 // loop_footer_branch
    %13 = sbr.rel target = $region3
  $region8: #{tpu_custom_call.1} parent=0 // loop_exit
    _

</llo_original>
